<compile_context>
chip_gen: v5e
topology: v5e:2x2
jax: 0.10.0
libtpu: 0.0.40
codegen_flags: <defaults>
</compile_context>

<pallas_src>
import jax
import jax.numpy as jnp
from jax.experimental import pallas as pl
from jax.experimental.pallas import tpu as pltpu


def _concat_dma_kernel(x1_hbm, sep_hbm, x2_hbm, out_hbm, sem):
    """Three HBM->HBM DMAs: x1 -> rows [0,S1), sep -> row S1, x2 -> rows [S1+1, ...)."""
    s1 = x1_hbm.shape[0]
    s2 = x2_hbm.shape[0]

    cp1 = pltpu.make_async_copy(x1_hbm, out_hbm.at[pl.ds(0, s1)], sem.at[0])
    cp2 = pltpu.make_async_copy(sep_hbm, out_hbm.at[pl.ds(s1, 1)], sem.at[1])
    cp3 = pltpu.make_async_copy(x2_hbm, out_hbm.at[pl.ds(s1 + 1, s2)], sem.at[2])

    # Issue all three copies so they run concurrently on the DMA engine.
    cp1.start()
    cp2.start()
    cp3.start()

    # Block until every copy has landed in the output.
    cp1.wait()
    cp2.wait()
    cp3.wait()


def concatenate_sentences(x1, sep, x2):
    """Concatenate two token-embedding sequences with a separator row.

    x1:  (S1, D)
    sep: (1,  D)  -- embedding of the literal space character
    x2:  (S2, D)
    returns (S1 + 1 + S2, D)

    NOTE: at tiny sizes this is dominated by fixed launch + DMA-issue latency
    (XLA's native `jnp.concatenate` is equally good there); this formulation
    scales to arbitrary sequence lengths with zero VMEM footprint.
    """
    s1, d = x1.shape
    s2, d2 = x2.shape
    assert d == d2 and sep.shape == (1, d), (x1.shape, sep.shape, x2.shape)
    out_len = s1 + 1 + s2

    itemsize = jnp.dtype(x1.dtype).itemsize
    total_bytes = out_len * d * itemsize  # read once + written once
    cost = pl.CostEstimate(flops=0, transcendentals=0,
                           bytes_accessed=2 * total_bytes)

    return pl.pallas_call(
        _concat_dma_kernel,
        out_shape=jax.ShapeDtypeStruct((out_len, d), x1.dtype),
        in_specs=[
            pl.BlockSpec(memory_space=pl.ANY),  # x1 stays in HBM
            pl.BlockSpec(memory_space=pl.ANY),  # sep stays in HBM
            pl.BlockSpec(memory_space=pl.ANY),  # x2 stays in HBM
        ],
        out_specs=pl.BlockSpec(memory_space=pl.ANY),  # output written via DMA
        scratch_shapes=[pltpu.SemaphoreType.DMA((3,))],
        cost_estimate=cost,
    )(x1, sep, x2)


if __name__ == "__main__":
    key = jax.random.PRNGKey(0)
    k1, k2, k3 = jax.random.split(key, 3)

    # Small sentence lengths; D maps to the 128-lane axis.  S2 deliberately
    # "ragged" and the x2 write starts at a sublane-misaligned row (S1 + 1)
    # to show the DMA path has no alignment penalty or constraint.
    S1, S2, D = 8, 5, 128

    # "input_1" and "input_2" as token-embedding sequences.
    x1 = jax.random.normal(k1, (S1, D), dtype=jnp.float32)
    x2 = jax.random.normal(k2, (S2, D), dtype=jnp.float32)
    # Deterministic embedding for the space separator (module has no params).
    sep = jax.random.normal(k3, (1, D), dtype=jnp.float32)

    out = concatenate_sentences(x1, sep, x2)
    out = jax.block_until_ready(out)

    # Reference: plain-JAX concatenation, mirroring f"{input_1} {input_2}".
    ref = jnp.concatenate([x1, sep, x2], axis=0)

    assert out.shape == (S1 + 1 + S2, D), out.shape
    assert jnp.allclose(out, ref), "mismatch vs reference concatenation"

    print("KERNEL_OK")
</pallas_src>

<mosaic_0001>
module attributes {stable_mosaic.version = 11 : i64} {
  func.func @_concat_dma_kernel(%arg0: memref<8x128xf32, #tpu.memory_space<any>>, %arg1: memref<1x128xf32, #tpu.memory_space<any>>, %arg2: memref<5x128xf32, #tpu.memory_space<any>>, %arg3: memref<14x128xf32, #tpu.memory_space<any>>, %arg4: memref<3x!tpu.dma_semaphore, #tpu.memory_space<semaphore_mem>>) attributes {dimension_semantics = [], scalar_prefetch = 0 : i64, scratch_operands = 1 : i64, tpu.core_type = #tpu.core_type<tc>} {
    %c0_i32 = arith.constant 0 : i32
    %c0_i32_0 = arith.constant 0 : i32
    %c0_i32_1 = arith.constant 0 : i32
    %0 = tpu.memref_slice %arg3[%c0_i32_0, %c0_i32_1] : memref<14x128xf32, #tpu.memory_space<any>> -> memref<8x128xf32, #tpu.memory_space<any>>
    %1 = tpu.memref_slice %arg4[%c0_i32] : memref<3x!tpu.dma_semaphore, #tpu.memory_space<semaphore_mem>> -> memref<1x!tpu.dma_semaphore, #tpu.memory_space<semaphore_mem>>
    %2 = tpu.memref_squeeze %1 : memref<1x!tpu.dma_semaphore, #tpu.memory_space<semaphore_mem>> -> memref<!tpu.dma_semaphore, #tpu.memory_space<semaphore_mem>>
    tpu.enqueue_dma source(%arg0 : memref<8x128xf32, #tpu.memory_space<any>>) target(%0 : memref<8x128xf32, #tpu.memory_space<any>>) target_semaphore(%2 : memref<!tpu.dma_semaphore, #tpu.memory_space<semaphore_mem>>)
    %c1_i32 = arith.constant 1 : i32
    %c8_i32 = arith.constant 8 : i32
    %c0_i32_2 = arith.constant 0 : i32
    %3 = tpu.memref_slice %arg3[%c8_i32, %c0_i32_2] : memref<14x128xf32, #tpu.memory_space<any>> -> memref<1x128xf32, #tpu.memory_space<any>>
    %4 = tpu.memref_slice %arg4[%c1_i32] : memref<3x!tpu.dma_semaphore, #tpu.memory_space<semaphore_mem>> -> memref<1x!tpu.dma_semaphore, #tpu.memory_space<semaphore_mem>>
    %5 = tpu.memref_squeeze %4 : memref<1x!tpu.dma_semaphore, #tpu.memory_space<semaphore_mem>> -> memref<!tpu.dma_semaphore, #tpu.memory_space<semaphore_mem>>
    tpu.enqueue_dma source(%arg1 : memref<1x128xf32, #tpu.memory_space<any>>) target(%3 : memref<1x128xf32, #tpu.memory_space<any>>) target_semaphore(%5 : memref<!tpu.dma_semaphore, #tpu.memory_space<semaphore_mem>>)
    %c2_i32 = arith.constant 2 : i32
    %c9_i32 = arith.constant 9 : i32
    %c0_i32_3 = arith.constant 0 : i32
    %6 = tpu.memref_slice %arg3[%c9_i32, %c0_i32_3] : memref<14x128xf32, #tpu.memory_space<any>> -> memref<5x128xf32, #tpu.memory_space<any>>
    %7 = tpu.memref_slice %arg4[%c2_i32] : memref<3x!tpu.dma_semaphore, #tpu.memory_space<semaphore_mem>> -> memref<1x!tpu.dma_semaphore, #tpu.memory_space<semaphore_mem>>
    %8 = tpu.memref_squeeze %7 : memref<1x!tpu.dma_semaphore, #tpu.memory_space<semaphore_mem>> -> memref<!tpu.dma_semaphore, #tpu.memory_space<semaphore_mem>>
    tpu.enqueue_dma source(%arg2 : memref<5x128xf32, #tpu.memory_space<any>>) target(%6 : memref<5x128xf32, #tpu.memory_space<any>>) target_semaphore(%8 : memref<!tpu.dma_semaphore, #tpu.memory_space<semaphore_mem>>)
    %c0_i32_4 = arith.constant 0 : i32
    %c0_i32_5 = arith.constant 0 : i32
    %c0_i32_6 = arith.constant 0 : i32
    %9 = tpu.memref_slice %arg3[%c0_i32_5, %c0_i32_6] : memref<14x128xf32, #tpu.memory_space<any>> -> memref<8x128xf32, #tpu.memory_space<any>>
    %10 = tpu.memref_slice %arg4[%c0_i32_4] : memref<3x!tpu.dma_semaphore, #tpu.memory_space<semaphore_mem>> -> memref<1x!tpu.dma_semaphore, #tpu.memory_space<semaphore_mem>>
    %11 = tpu.memref_squeeze %10 : memref<1x!tpu.dma_semaphore, #tpu.memory_space<semaphore_mem>> -> memref<!tpu.dma_semaphore, #tpu.memory_space<semaphore_mem>>
    tpu.wait_dma2 semaphore(%11 : memref<!tpu.dma_semaphore, #tpu.memory_space<semaphore_mem>>) src(%arg0 : memref<8x128xf32, #tpu.memory_space<any>>) dst(%9 : memref<8x128xf32, #tpu.memory_space<any>>)
    %c1_i32_7 = arith.constant 1 : i32
    %c8_i32_8 = arith.constant 8 : i32
    %c0_i32_9 = arith.constant 0 : i32
    %12 = tpu.memref_slice %arg3[%c8_i32_8, %c0_i32_9] : memref<14x128xf32, #tpu.memory_space<any>> -> memref<1x128xf32, #tpu.memory_space<any>>
    %13 = tpu.memref_slice %arg4[%c1_i32_7] : memref<3x!tpu.dma_semaphore, #tpu.memory_space<semaphore_mem>> -> memref<1x!tpu.dma_semaphore, #tpu.memory_space<semaphore_mem>>
    %14 = tpu.memref_squeeze %13 : memref<1x!tpu.dma_semaphore, #tpu.memory_space<semaphore_mem>> -> memref<!tpu.dma_semaphore, #tpu.memory_space<semaphore_mem>>
    tpu.wait_dma2 semaphore(%14 : memref<!tpu.dma_semaphore, #tpu.memory_space<semaphore_mem>>) src(%arg1 : memref<1x128xf32, #tpu.memory_space<any>>) dst(%12 : memref<1x128xf32, #tpu.memory_space<any>>)
    %c2_i32_10 = arith.constant 2 : i32
    %c9_i32_11 = arith.constant 9 : i32
    %c0_i32_12 = arith.constant 0 : i32
    %15 = tpu.memref_slice %arg3[%c9_i32_11, %c0_i32_12] : memref<14x128xf32, #tpu.memory_space<any>> -> memref<5x128xf32, #tpu.memory_space<any>>
    %16 = tpu.memref_slice %arg4[%c2_i32_10] : memref<3x!tpu.dma_semaphore, #tpu.memory_space<semaphore_mem>> -> memref<1x!tpu.dma_semaphore, #tpu.memory_space<semaphore_mem>>
    %17 = tpu.memref_squeeze %16 : memref<1x!tpu.dma_semaphore, #tpu.memory_space<semaphore_mem>> -> memref<!tpu.dma_semaphore, #tpu.memory_space<semaphore_mem>>
    tpu.wait_dma2 semaphore(%17 : memref<!tpu.dma_semaphore, #tpu.memory_space<semaphore_mem>>) src(%arg2 : memref<5x128xf32, #tpu.memory_space<any>>) dst(%15 : memref<5x128xf32, #tpu.memory_space<any>>)
    return
  }
}

</mosaic_0001>

<llo_original>
// kernel: tpu_custom_call.1
$region0: #{tpu_custom_call.1}
  #allocation0 [shape = 'u32[]', space=smem, size = 0x4, offset = 0x4, fixed_abs, tag = 'smem constant byte address 0x4 - core index']
  #allocation1 [shape = 'u32[72,128]{1,0:T(1,128)}', space=vmem, size = 0x9000, scoped, tag = 'internal scratch']
  #allocation2 [shape = 's32[3]{0}', space=sflag, size = 0xc, scoped, tag = 'scratch operand']
  #allocation3 [shape = 's32[]', space=sflag, size = 0x4, offset = 0, fixed_abs, tag = 'sflag constant byte address 0x0 - dummy sync flag']
  #allocation4 [shape = 'u32[0]{0}', space=smem, size = 0, offset = 0, fixed_abs, tag = 'smem constant byte address 0x0 - null']
  #allocation5 [shape = 's32[]', space=sflag, size = 0x4, offset = 0, fixed_abs, tag = 'sflag constant byte address 0x0 - dummy sync flag']
  #allocation6 [shape = 'u32[0]{0}', space=smem, size = 0, offset = 0, fixed_abs, tag = 'smem constant byte address 0x0 - null']
  #allocation7 [shape = 's32[]', space=sflag, size = 0x4, offset = 0, fixed_abs, tag = 'sflag constant byte address 0x0 - dummy sync flag']
  #allocation8 [shape = 'u32[0]{0}', space=smem, size = 0, offset = 0, fixed_abs, tag = 'smem constant byte address 0x0 - null']
  %s0 = inlined_call_operand.hbm [shape: f32[8,128], index: 0, kind: input, shape index: {}]
  %s1 = inlined_call_operand.hbm [shape: f32[1,128], index: 1, kind: input, shape index: {}]
  %s2 = inlined_call_operand.hbm [shape: f32[5,128], index: 2, kind: input, shape index: {}]
  %s3 = inlined_call_operand.hbm [shape: f32[14,128], index: 3, kind: output, shape index: {}]
  %s4 = sld [smem:[#allocation0]]
  $region2: #{tpu_custom_call.1} parent=0
    _
  %s6 = ssub.s32 1, %s4
  %s7 = scalar_select 0, %s6, %s4
  %s9 = sshll.u32 1, 14
  %s10 = sxor.u32 4294967295, %s9
  %s12 = sshll.u32 %s0, 4
  %s13 = int_to_ptr.hbm [resolvable:$true] %s12
  %s14 = sshll.u32 %s3, 4
  %s15 = int_to_ptr.hbm [resolvable:$true] %s14
  %18 = dma.general %s13, 128, %s15, [#allocation2], [#allocation3], [#allocation4], 0, 0
  %s19 = scalar_lea.hbm %s3, 8
  %s20 = scalar_lea.sflag [#allocation2], 1
  %s22 = sshll.u32 1, 14
  %s23 = sxor.u32 4294967295, %s22
  %s25 = sshll.u32 %s1, 4
  %s26 = int_to_ptr.hbm [resolvable:$true] %s25
  %s27 = sshll.u32 %s19, 4
  %s28 = int_to_ptr.hbm [resolvable:$true] %s27
  %31 = dma.general %s26, 16, %s28, %s20, [#allocation5], [#allocation6], 0, 0
  %s32 = scalar_lea.hbm %s3, 9
  %s33 = scalar_lea.sflag [#allocation2], 2
  %s35 = sshll.u32 1, 14
  %s36 = sxor.u32 4294967295, %s35
  %s38 = sshll.u32 %s2, 4
  %s39 = int_to_ptr.hbm [resolvable:$true] %s38
  %s40 = sshll.u32 %s32, 4
  %s41 = int_to_ptr.hbm [resolvable:$true] %s40
  %44 = dma.general %s39, 80, %s41, %s33, [#allocation7], [#allocation8], 0, 0
  %s45 = smul.u32 8, 1
  %s46 = sshll.u32 %s45, 4
  %47 = dma.done [#allocation2], %s46
  %s48 = smul.u32 1, 1
  %s49 = sshll.u32 %s48, 4
  %50 = dma.done %s20, %s49
  %s51 = smul.u32 5, 1
  %s52 = sshll.u32 %s51, 4
  %53 = dma.done %s33, %s52
  %54 = vsyncmov [#allocation2]
  %s55 = vpop.sfrf %54
  %p56 = scmp.eq.s32.totalorder %s55, 0
  %p57 = pneg %p56
  %59 = shalt.err (%p57)
  %s60 = scalar_lea.sflag [#allocation2], 1
  %61 = vsyncmov %s60
  %s62 = vpop.sfrf %61
  %p63 = scmp.eq.s32.totalorder %s62, 0
  %p64 = pneg %p63
  %66 = shalt.err (%p64)
  %s67 = scalar_lea.sflag [#allocation2], 2
  %68 = vsyncmov %s67
  %s69 = vpop.sfrf %68
  %p70 = scmp.eq.s32.totalorder %s69, 0
  %p71 = pneg %p70
  %73 = shalt.err (%p71)

</llo_original>
